<compile_context>
chip_gen: v7x
topology: tpu7x:2x2x1
jax: 0.10.0
libtpu: 0.0.40
codegen_flags: <defaults>
</compile_context>

<pallas_src>
import jax
import jax.numpy as jnp
from jax.experimental import pallas as pl
from jax.experimental.pallas import tpu as pltpu


_LANES = 128
_SUBLANES_BF16 = 16   # bf16 packs 16 rows per sublane-tile


def _round_up(x, m):
    return (x + m - 1) // m * m


def _pad_to(a, shape):
    return jnp.pad(a, [(0, t - s) for s, t in zip(a.shape, shape)])


# ---------------------------------------------------------------------------
# Kernel: one EquivariantLayer per grid step (layer axis innermost).
#   y1 = x @ W1 + b1                     (per-element transform)
#   y2 = (sum_N x) @ W2 + b2             (set transform, UNMASKED sum as in the
#                                         PyTorch module)
#   x  = m*y1 + (m/cnt)*y2               (mask column broadcast on the VPU)
#   tanh between layers, identity after the last (final_activation=None).
# The activation lives in a VMEM scratch across layer steps; only the final
# layer writes the output block.
# ---------------------------------------------------------------------------
def _equivariant_layer_kernel(x_ref, m_ref, ic_ref, w1_ref, w2_ref,
                              b1_ref, b2_ref, o_ref, act_ref):
    layer = pl.program_id(1)
    n_layers = pl.num_programs(1)
    bt, n, d = act_ref.shape

    # Layer 0: pull the bf16 input block into the resident f32 activation.
    @pl.when(layer == 0)
    def _():
        act_ref[...] = x_ref[...].astype(jnp.float32)

    x = act_ref[...]                      # (bt, n, d) f32, resident across layers
    m = m_ref[...]                        # (bt, n, 1) f32 mask column
    mic = m * ic_ref[...]                 # (bt, n, 1) mask / valid-count (f32 exact)

    w1 = w1_ref[0]                        # (d, d) bf16 (only this layer's weights)
    w2 = w2_ref[0]
    b1 = b1_ref[0]                        # (1, d) f32
    b2 = b2_ref[0]

    # MXU in bf16, accumulate f32.  Flatten to one lane-dense (bt*n, d) matmul.
    xb = x.astype(jnp.bfloat16).reshape(bt * n, d)
    y1 = jnp.dot(xb, w1, preferred_element_type=jnp.float32) + b1
    s = jnp.sum(x, axis=1).astype(jnp.bfloat16)          # (bt, d) unmasked set sum
    y2 = jnp.dot(s, w2, preferred_element_type=jnp.float32) + b2

    y = m * y1.reshape(bt, n, d) + mic * y2[:, None, :]  # f32 epilogue (v5e-safe)

    @pl.when(layer < n_layers - 1)        # hidden activation = Tanh
    def _():
        act_ref[...] = jnp.tanh(y)

    @pl.when(layer == n_layers - 1)       # final activation = Identity
    def _():
        o_ref[...] = y.astype(o_ref.dtype)


def _pick_batch_tile(batch, n_pad, target_rows=512):
    """Batch tile giving ~target_rows rows per matmul.  Only split for a second
    grid step when each half still feeds >=128 rows to the MXU (avoid bt=1
    degenerate tiles)."""
    bt = max(1, min(batch, target_rows // max(n_pad, 1)))
    if bt >= batch and batch > 1 and (batch // 2) * n_pad >= 128:
        bt = batch // 2
    return bt


def equivariant_net_forward(params, x, mask):
    """params: list of dicts w1/w2:(Din,Dout), b1/b2:(1,Dout).
       x: (B, N, in_dim); mask: (B, N, M) (only mask[..., 0] is used)."""
    B, N, in_dim = x.shape
    n_layers = len(params)
    out_dim = params[-1]["w1"].shape[1]

    dims = [in_dim] + [p["w1"].shape[1] for p in params]
    d_pad = _round_up(max(dims), _LANES)
    n_pad = _round_up(N, _SUBLANES_BF16)
    bt = _pick_batch_tile(B, n_pad)
    b_pad = _round_up(B, bt)              # pad batch so the grid divides evenly
    grid_b = b_pad // bt

    f32, bf16 = jnp.float32, jnp.bfloat16
    # Stack + zero-pad weights (bf16 for the MXU) and biases (f32 epilogue).
    w1 = jnp.stack([_pad_to(p["w1"].astype(f32), (d_pad, d_pad)) for p in params]).astype(bf16)
    w2 = jnp.stack([_pad_to(p["w2"].astype(f32), (d_pad, d_pad)) for p in params]).astype(bf16)
    b1 = jnp.stack([_pad_to(p["b1"].astype(f32), (1, d_pad)) for p in params])
    b2 = jnp.stack([_pad_to(p["b2"].astype(f32), (1, d_pad)) for p in params])

    # Mask COLUMN only (no lane-broadcast mask in HBM) + hoisted 1/valid-count.
    m = mask[..., 0:1].astype(f32)                          # (B, N, 1)
    cnt = jnp.sum(m, axis=-2, keepdims=True)                # (B, 1, 1); 0-valid sets
    m_p = jnp.zeros((b_pad, n_pad, 1), f32).at[:B, :N].set(m)   # keep ref 0/0 NaN behavior
    cnt_p = jnp.ones((b_pad, 1, 1), f32).at[:B].set(cnt)    # dummy padded sets: cnt=1
    inv_cnt = 1.0 / cnt_p

    # bf16 input activation (padded rows/lanes are zero -> exact no-ops downstream).
    x_p = jnp.zeros((b_pad, n_pad, d_pad), bf16).at[:B, :N, :in_dim].set(x.astype(bf16))

    out_dtype = x.dtype

    # VMEM budget: generation-aware cap with headroom, margin for temporaries.
    try:
        vmem_cap = pltpu.get_tpu_info().vmem_capacity_bytes
    except Exception:
        vmem_cap = 64 << 20
    blk = bt * n_pad * d_pad
    need = (blk * 4                                     # resident activation scratch
            + 2 * blk * 2                               # x block (bf16, double-buffered)
            + 2 * blk * jnp.dtype(out_dtype).itemsize   # output block
            + 2 * (bt * n_pad + bt) * 4                 # mask column + 1/cnt
            + 4 * d_pad * d_pad * 2                     # W1+W2, one layer, double-buffered
            + 4 * d_pad * 4                             # biases
            + 6 * blk * 4)                              # y1/y/temps + spill margin
    vmem_limit = int(min(max(2 * need, 32 << 20), int(0.75 * vmem_cap)))

    out = pl.pallas_call(
        _equivariant_layer_kernel,
        out_shape=jax.ShapeDtypeStruct((b_pad, n_pad, d_pad), out_dtype),
        grid_spec=pltpu.PrefetchScalarGridSpec(
            num_scalar_prefetch=0,
            grid=(grid_b, n_layers),                           # layer axis innermost
            in_specs=[
                pl.BlockSpec((bt, n_pad, d_pad), lambda b, l: (b, 0, 0)),  # x (bf16)
                pl.BlockSpec((bt, n_pad, 1), lambda b, l: (b, 0, 0)),      # mask column
                pl.BlockSpec((bt, 1, 1), lambda b, l: (b, 0, 0)),          # 1/count
                pl.BlockSpec((1, d_pad, d_pad), lambda b, l: (l, 0, 0)),   # W1[layer]
                pl.BlockSpec((1, d_pad, d_pad), lambda b, l: (l, 0, 0)),   # W2[layer]
                pl.BlockSpec((1, 1, d_pad), lambda b, l: (l, 0, 0)),       # b1[layer]
                pl.BlockSpec((1, 1, d_pad), lambda b, l: (l, 0, 0)),       # b2[layer]
            ],
            out_specs=pl.BlockSpec((bt, n_pad, d_pad), lambda b, l: (b, 0, 0)),
            scratch_shapes=[pltpu.VMEM((bt, n_pad, d_pad), jnp.float32)],  # activation
        ),
        compiler_params=pltpu.CompilerParams(
            dimension_semantics=("parallel", "arbitrary"),
            vmem_limit_bytes=vmem_limit),
    )(x_p, m_p, inv_cnt, w1, w2, b1, b2)

    # Strip padding back to the logical output shape.
    return out[:B, :N, :out_dim].astype(x.dtype)


# ---------------------------------------------------------------------------
# Parameter init (matches nn.Linear default scale) and pure-JAX f32 reference.
# ---------------------------------------------------------------------------
def init_equivariant_net_params(key, in_dim, hidden_dims, out_dim):
    dims = [in_dim] + list(hidden_dims) + [out_dim]
    params = []
    for din, dout in zip(dims[:-1], dims[1:]):
        k1, k2, k3, k4, key = jax.random.split(key, 5)
        bound = 1.0 / jnp.sqrt(din)
        params.append(dict(
            w1=jax.random.uniform(k1, (din, dout), jnp.float32, -bound, bound),
            b1=jax.random.uniform(k2, (1, dout), jnp.float32, -bound, bound),
            w2=jax.random.uniform(k3, (din, dout), jnp.float32, -bound, bound),
            b2=jax.random.uniform(k4, (1, dout), jnp.float32, -bound, bound),
        ))
    return params


def _reference_forward(params, x, mask):
    m = mask[..., 0:1]
    n_layers = len(params)
    for i, p in enumerate(params):
        y1 = x @ p["w1"] + p["b1"]
        y2 = jnp.sum(x, axis=-2, keepdims=True) @ p["w2"] + p["b2"]
        cnt = jnp.sum(m, axis=-2, keepdims=True)
        x = y1 * m + (y2 * m) / cnt
        if i < n_layers - 1:
            x = jnp.tanh(x)
    return x


if __name__ == "__main__":
    key = jax.random.PRNGKey(0)
    kx, kp = jax.random.split(key)

    B, N = 2, 8
    in_dim, hidden_dims, out_dim = 4, [32, 32], 4

    x = jax.random.normal(kx, (B, N, in_dim), jnp.float32)
    # Binary mask: first 6 elements valid in batch 0, first 5 in batch 1.
    valid = jnp.array([6, 5])
    mask = (jnp.arange(N)[None, :, None] < valid[:, None, None]).astype(jnp.float32)
    mask = jnp.broadcast_to(mask, (B, N, in_dim))

    params = init_equivariant_net_params(kp, in_dim, hidden_dims, out_dim)

    out = equivariant_net_forward(params, x, mask)
    out = jax.block_until_ready(out)

    ref = _reference_forward(params, x, mask)
    assert out.shape == (B, N, out_dim)
    # bf16 MXU operands (f32 accumulate): compare against f32 reference with a
    # bf16-appropriate tolerance.
    assert jnp.allclose(out, ref, atol=5e-2, rtol=5e-2), "mismatch vs reference"

    print("KERNEL_OK")
</pallas_src>

<mosaic_0001>
module attributes {stable_mosaic.version = 11 : i64} {
  func.func @_equivariant_layer_kernel(%arg0: i32, %arg1: i32, %arg2: memref<2x16x128xbf16, #tpu.memory_space<vmem>>, %arg3: memref<2x16x1xf32, #tpu.memory_space<vmem>>, %arg4: memref<2x1x1xf32, #tpu.memory_space<vmem>>, %arg5: memref<1x128x128xbf16, #tpu.memory_space<vmem>>, %arg6: memref<1x128x128xbf16, #tpu.memory_space<vmem>>, %arg7: memref<1x1x128xf32, #tpu.memory_space<vmem>>, %arg8: memref<1x1x128xf32, #tpu.memory_space<vmem>>, %arg9: memref<2x16x128xf32, #tpu.memory_space<vmem>>, %arg10: memref<2x16x128xf32, #tpu.memory_space<vmem>>) attributes {dimension_semantics = [#tpu.dimension_semantics<parallel>, #tpu.dimension_semantics<arbitrary>], iteration_bounds = array<i64: 1, 3>, scalar_prefetch = 0 : i64, scratch_operands = 1 : i64, tpu.core_type = #tpu.core_type<tc>, window_params = [{transform_indices = @transform_0, window_bounds = array<i64: 2, 16, 128>}, {transform_indices = @transform_1, window_bounds = array<i64: 2, 16, 1>}, {transform_indices = @transform_2, window_bounds = array<i64: 2, 1, 1>}, {transform_indices = @transform_3, window_bounds = array<i64: 1, 128, 128>}, {transform_indices = @transform_4, window_bounds = array<i64: 1, 128, 128>}, {transform_indices = @transform_5, window_bounds = array<i64: 1, 1, 128>}, {transform_indices = @transform_6, window_bounds = array<i64: 1, 1, 128>}, {transform_indices = @transform_7, window_bounds = array<i64: 2, 16, 128>}]} {
    %c0_i32 = arith.constant 0 : i32
    %0 = arith.cmpi eq, %arg1, %c0_i32 : i32
    %1 = arith.extui %0 : i1 to i32
    %c0_i32_0 = arith.constant 0 : i32
    %2 = arith.cmpi ne, %1, %c0_i32_0 : i32
    scf.if %2 {
      %c0_26 = arith.constant 0 : index
      %c0_27 = arith.constant 0 : index
      %c0_28 = arith.constant 0 : index
      %40 = vector.load %arg2[%c0_26, %c0_27, %c0_28] : memref<2x16x128xbf16, #tpu.memory_space<vmem>>, vector<2x16x128xbf16>
      %41 = arith.extf %40 : vector<2x16x128xbf16> to vector<2x16x128xf32>
      %c0_29 = arith.constant 0 : index
      %c0_30 = arith.constant 0 : index
      %c0_31 = arith.constant 0 : index
      %42 = vector.load %arg10[%c0_29, %c0_30, %c0_31] : memref<2x16x128xf32, #tpu.memory_space<vmem>>, vector<2x16x128xf32>
      tpu.vector_store %arg10[%c0_29, %c0_30, %c0_31], %41 {strides = array<i32>} : memref<2x16x128xf32, #tpu.memory_space<vmem>>, vector<2x16x128xf32>,
    } else {
    }
    %c0 = arith.constant 0 : index
    %c0_1 = arith.constant 0 : index
    %c0_2 = arith.constant 0 : index
    %3 = vector.load %arg10[%c0, %c0_1, %c0_2] : memref<2x16x128xf32, #tpu.memory_space<vmem>>, vector<2x16x128xf32>
    %c0_3 = arith.constant 0 : index
    %c0_4 = arith.constant 0 : index
    %c0_5 = arith.constant 0 : index
    %4 = vector.load %arg3[%c0_3, %c0_4, %c0_5] : memref<2x16x1xf32, #tpu.memory_space<vmem>>, vector<2x16x1xf32>
    %c0_6 = arith.constant 0 : index
    %c0_7 = arith.constant 0 : index
    %c0_8 = arith.constant 0 : index
    %5 = vector.load %arg4[%c0_6, %c0_7, %c0_8] : memref<2x1x1xf32, #tpu.memory_space<vmem>>, vector<2x1x1xf32>
    %6 = vector.broadcast %5 : vector<2x1x1xf32> to vector<2x16x1xf32>
    %7 = arith.mulf %4, %6 : vector<2x16x1xf32>
    %c0_9 = arith.constant 0 : index
    %c0_10 = arith.constant 0 : index
    %c0_11 = arith.constant 0 : index
    %8 = vector.load %arg5[%c0_9, %c0_10, %c0_11] : memref<1x128x128xbf16, #tpu.memory_space<vmem>>, vector<1x128x128xbf16>
    %9 = vector.shape_cast %8 : vector<1x128x128xbf16> to vector<128x128xbf16>
    %c0_12 = arith.constant 0 : index
    %c0_13 = arith.constant 0 : index
    %c0_14 = arith.constant 0 : index
    %10 = vector.load %arg6[%c0_12, %c0_13, %c0_14] : memref<1x128x128xbf16, #tpu.memory_space<vmem>>, vector<1x128x128xbf16>
    %11 = vector.shape_cast %10 : vector<1x128x128xbf16> to vector<128x128xbf16>
    %c0_15 = arith.constant 0 : index
    %c0_16 = arith.constant 0 : index
    %c0_17 = arith.constant 0 : index
    %12 = vector.load %arg7[%c0_15, %c0_16, %c0_17] : memref<1x1x128xf32, #tpu.memory_space<vmem>>, vector<1x1x128xf32>
    %13 = vector.shape_cast %12 : vector<1x1x128xf32> to vector<1x128xf32>
    %c0_18 = arith.constant 0 : index
    %c0_19 = arith.constant 0 : index
    %c0_20 = arith.constant 0 : index
    %14 = vector.load %arg8[%c0_18, %c0_19, %c0_20] : memref<1x1x128xf32, #tpu.memory_space<vmem>>, vector<1x1x128xf32>
    %15 = vector.shape_cast %14 : vector<1x1x128xf32> to vector<1x128xf32>
    %16 = arith.truncf %3 : vector<2x16x128xf32> to vector<2x16x128xbf16>
    %17 = vector.shape_cast %16 : vector<2x16x128xbf16> to vector<32x128xbf16>
    %cst = arith.constant dense<0.000000e+00> : vector<32x128xf32>
    %18 = tpu.matmul %17, %9, %cst {dimension_numbers = #tpu.dot_dimension_numbers<[1], [0], [0], [1], [0, 0, 1, 1], [], []>} : vector<32x128xbf16>, vector<128x128xbf16>, vector<32x128xf32> -> vector<32x128xf32>
    %19 = vector.broadcast %13 : vector<1x128xf32> to vector<32x128xf32>
    %20 = arith.addf %18, %19 : vector<32x128xf32>
    %cst_21 = arith.constant dense<0.000000e+00> : vector<2x128xf32>
    %21 = vector.multi_reduction <add>, %3, %cst_21 [1] : vector<2x16x128xf32> to vector<2x128xf32>
    %22 = arith.truncf %21 : vector<2x128xf32> to vector<2x128xbf16>
    %cst_22 = arith.constant dense<0.000000e+00> : vector<2x128xf32>
    %23 = tpu.matmul %22, %11, %cst_22 {dimension_numbers = #tpu.dot_dimension_numbers<[1], [0], [0], [1], [0, 0, 1, 1], [], []>} : vector<2x128xbf16>, vector<128x128xbf16>, vector<2x128xf32> -> vector<2x128xf32>
    %24 = vector.broadcast %15 : vector<1x128xf32> to vector<2x128xf32>
    %25 = arith.addf %23, %24 : vector<2x128xf32>
    %26 = vector.shape_cast %20 : vector<32x128xf32> to vector<2x16x128xf32>
    %27 = vector.broadcast %4 : vector<2x16x1xf32> to vector<2x16x128xf32>
    %28 = arith.mulf %27, %26 : vector<2x16x128xf32>
    %29 = vector.shape_cast %25 : vector<2x128xf32> to vector<2x1x128xf32>
    %30 = vector.broadcast %7 : vector<2x16x1xf32> to vector<2x16x128xf32>
    %31 = vector.broadcast %29 : vector<2x1x128xf32> to vector<2x16x128xf32>
    %32 = arith.mulf %30, %31 : vector<2x16x128xf32>
    %33 = arith.addf %28, %32 : vector<2x16x128xf32>
    %c2_i32 = arith.constant 2 : i32
    %34 = arith.cmpi slt, %arg1, %c2_i32 : i32
    %35 = arith.extui %34 : i1 to i32
    %c0_i32_23 = arith.constant 0 : i32
    %36 = arith.cmpi ne, %35, %c0_i32_23 : i32
    scf.if %36 {
      %40 = math.tanh %33 : vector<2x16x128xf32>
      %c0_26 = arith.constant 0 : index
      %c0_27 = arith.constant 0 : index
      %c0_28 = arith.constant 0 : index
      %41 = vector.load %arg10[%c0_26, %c0_27, %c0_28] : memref<2x16x128xf32, #tpu.memory_space<vmem>>, vector<2x16x128xf32>
      tpu.vector_store %arg10[%c0_26, %c0_27, %c0_28], %40 {strides = array<i32>} : memref<2x16x128xf32, #tpu.memory_space<vmem>>, vector<2x16x128xf32>,
    } else {
    }
    %c2_i32_24 = arith.constant 2 : i32
    %37 = arith.cmpi eq, %arg1, %c2_i32_24 : i32
    %38 = arith.extui %37 : i1 to i32
    %c0_i32_25 = arith.constant 0 : i32
    %39 = arith.cmpi ne, %38, %c0_i32_25 : i32
    scf.if %39 {
      %c0_26 = arith.constant 0 : index
      %c0_27 = arith.constant 0 : index
      %c0_28 = arith.constant 0 : index
      %40 = vector.load %arg9[%c0_26, %c0_27, %c0_28] : memref<2x16x128xf32, #tpu.memory_space<vmem>>, vector<2x16x128xf32>
      tpu.vector_store %arg9[%c0_26, %c0_27, %c0_28], %33 {strides = array<i32>} : memref<2x16x128xf32, #tpu.memory_space<vmem>>, vector<2x16x128xf32>,
    } else {
    }
    return
  }
  func.func @transform_0(%arg0: i32, %arg1: i32) -> (i32, i32, i32) {
    %c0_i32 = arith.constant 0 : i32
    %c0_i32_0 = arith.constant 0 : i32
    %c0_i32_1 = arith.constant 0 : i32
    return %arg0, %c0_i32, %c0_i32_0 : i32, i32, i32
  }
  func.func @transform_1(%arg0: i32, %arg1: i32) -> (i32, i32, i32) {
    %c0_i32 = arith.constant 0 : i32
    %c0_i32_0 = arith.constant 0 : i32
    %c0_i32_1 = arith.constant 0 : i32
    return %arg0, %c0_i32, %c0_i32_0 : i32, i32, i32
  }
  func.func @transform_2(%arg0: i32, %arg1: i32) -> (i32, i32, i32) {
    %c0_i32 = arith.constant 0 : i32
    %c0_i32_0 = arith.constant 0 : i32
    %c0_i32_1 = arith.constant 0 : i32
    return %arg0, %c0_i32, %c0_i32_0 : i32, i32, i32
  }
  func.func @transform_3(%arg0: i32, %arg1: i32) -> (i32, i32, i32) {
    %c0_i32 = arith.constant 0 : i32
    %c0_i32_0 = arith.constant 0 : i32
    %c0_i32_1 = arith.constant 0 : i32
    return %arg1, %c0_i32, %c0_i32_0 : i32, i32, i32
  }
  func.func @transform_4(%arg0: i32, %arg1: i32) -> (i32, i32, i32) {
    %c0_i32 = arith.constant 0 : i32
    %c0_i32_0 = arith.constant 0 : i32
    %c0_i32_1 = arith.constant 0 : i32
    return %arg1, %c0_i32, %c0_i32_0 : i32, i32, i32
  }
  func.func @transform_5(%arg0: i32, %arg1: i32) -> (i32, i32, i32) {
    %c0_i32 = arith.constant 0 : i32
    %c0_i32_0 = arith.constant 0 : i32
    %c0_i32_1 = arith.constant 0 : i32
    return %arg1, %c0_i32, %c0_i32_0 : i32, i32, i32
  }
  func.func @transform_6(%arg0: i32, %arg1: i32) -> (i32, i32, i32) {
    %c0_i32 = arith.constant 0 : i32
    %c0_i32_0 = arith.constant 0 : i32
    %c0_i32_1 = arith.constant 0 : i32
    return %arg1, %c0_i32, %c0_i32_0 : i32, i32, i32
  }
  func.func @transform_7(%arg0: i32, %arg1: i32) -> (i32, i32, i32) {
    %c0_i32 = arith.constant 0 : i32
    %c0_i32_0 = arith.constant 0 : i32
    %c0_i32_1 = arith.constant 0 : i32
    return %arg0, %c0_i32, %c0_i32_0 : i32, i32, i32
  }
}

</mosaic_0001>

<llo_original>
// kernel: tpu_custom_call.1
$region0: #{tpu_custom_call.1}
  #allocation0 [shape = 'u32[]', space=smem, size = 0x4, offset = 0x4, fixed_abs, tag = 'smem constant byte address 0x4 - core index']
  #allocation1 [shape = 'u32[144,128]{1,0:T(1,128)}', space=vmem, size = 0x12000, scoped, tag = 'internal scratch']
  #allocation2 [shape = 'f32[2,16,128]{2,1,0:T(8,128)}', space=vmem, size = 0x4000, scoped, tag = 'scratch operand']
  %s0 = inlined_call_operand.vmem [shape: bf16[2,16,128], index: 0, kind: input, shape index: {}]
  %s1 = inlined_call_operand.vmem [shape: f32[2,16,1], index: 1, kind: input, shape index: {}]
  %s2 = inlined_call_operand.vmem [shape: f32[2,1,1], index: 2, kind: input, shape index: {}]
  %s3 = inlined_call_operand.hbm [shape: bf16[3,128,128], index: 3, kind: input, shape index: {}]
  %s4 = inlined_call_operand.hbm [shape: bf16[3,128,128], index: 4, kind: input, shape index: {}]
  %s5 = inlined_call_operand.vmem [shape: f32[3,1,128], index: 5, kind: input, shape index: {}]
  %s6 = inlined_call_operand.vmem [shape: f32[3,1,128], index: 6, kind: input, shape index: {}]
  %s7 = inlined_call_operand.hbm [shape: f32[2,16,128], index: 7, kind: output, shape index: {}]
  %s8 = sld [smem:[#allocation0]]
  $region81: #{tpu_custom_call.1} parent=0
    _
  %s10 = ssub.s32 1, %s8
  %s11 = scalar_select 0, %s10, %s8
  $region1: #{tpu_custom_call.1} parent=0
    #allocation3 [shape = 'u8[65536]{0}', space=vmem, size = 0x10000, scoped, tag = 'input window, operand 3']
    #allocation4 [shape = 's32[2]{0}', space=sflag, size = 0x8, scoped, tag = 'scoped memory for tpu_custom_call.1']
    #allocation5 [shape = 's32[2]{0}', space=sflag, size = 0x8, scoped, tag = 'scoped memory for tpu_custom_call.1']
    #allocation6 [shape = 'u8[65536]{0}', space=vmem, size = 0x10000, scoped, tag = 'input window, operand 4']
    #allocation7 [shape = 's32[2]{0}', space=sflag, size = 0x8, scoped, tag = 'scoped memory for tpu_custom_call.1']
    #allocation8 [shape = 'u8[16384]{0}', space=vmem, size = 0x4000, scoped, tag = 'output window, operand 0, single buffered']
    %12 = vsyncpa [#allocation4], 0
    %s13 = scalar_lea.sflag [#allocation4], 1
    %14 = vsyncpa %s13, 0
    %15 = vsyncpa [#allocation7], 0
    %s16 = scalar_lea.sflag [#allocation7], 1
    %17 = vsyncpa %s16, 0
    %18 = vsyncpa [#allocation5], 0
    loop: start=0, step=1, limit=5
    $region2: #{tpu_custom_call.1} parent=1 // loop_pre_header
      _
    $region3: #{tpu_custom_call.1} parent=1 // loop_header
      %s20 = sphi 0, %s24
      %p21 = scmp.ge.s32.totalorder %s20, 5
      %s27 = sphi 0, %s39
      %s28 = sphi 0, %s35
      %s29 = sphi 0, %s27
      %s30 = sphi 0, %s28
      %s31 = sphi 0, %s29
      %s32 = sphi 0, %s30
      %s42 = sphi 0, %s44
      %s45 = sphi 0, %s42
      %s46 = sphi 0, %s45
      %s62 = sphi 0, %s46
      %s68 = sphi 0, %s70
      %s71 = sphi 0, %s68
      %s72 = sphi 0, %s71
      %s88 = sphi 0, %s72
      %s94 = sphi 0, %s96
      %s97 = sphi 0, %s94
      %s98 = sphi 0, %s97
      %s114 = sphi 0, %s98
      %s120 = sphi 0, %s122
      %s123 = sphi 0, %s120
      %s124 = sphi 0, %s123
      %s140 = sphi 0, %s124
      %s146 = sphi 0, %s148
      %s149 = sphi 0, %s146
      %s150 = sphi 0, %s149
      %s166 = sphi 0, %s150
      %s172 = sphi 0, %s174
      %s175 = sphi 0, %s172
      %s176 = sphi 0, %s175
      %s192 = sphi 0, %s176
      %s198 = sphi 0, %s200
      %s201 = sphi 0, %s198
      %s202 = sphi 0, %s201
      %s218 = sphi 0, %s202
      %s224 = sphi 0, %s226
      %s227 = sphi 0, %s224
      %s228 = sphi 0, %s227
      %s244 = sphi 0, %s228
    $region4: #{tpu_custom_call.1} parent=1 // loop_header_branch
      %23 = sbr.rel (%p21) target = $region8
    $region5: #{tpu_custom_call.1} parent=1 // loop_body
      %s25 = ssub.s32 %s20, 1
      %s26 = ssub.s32 %s20, 2
      %s33 = sadd.s32 1, %s28
      %p34 = scmp.ge.s32.totalorder %s33, 3
      %s35 = scalar_select %p34, 0, %s33
      %s36 = sadd.s32 1, %s27
      %s37 = scalar_select %p34, %s36, %s27
      %p38 = scmp.ge.s32.totalorder %s37, 1
      %s39 = scalar_select %p38, 0, %s37
      %s40 = ssub.s32 %s27, %s39
      %p41 = scmp.eq.s32.totalorder %s40, 0
      %s43 = sadd.s32 %s42, 1
      %s44 = scalar_select %p41, %s42, %s43
      %p47 = pneg %p41
      %p48 = scmp.eq.s32.totalorder %s20, 2
      %p49 = por %p47, %p48
      %p50 = scmp.ne.s32.totalorder %s42, %s45
      %p51 = scmp.eq.s32.totalorder %s20, 0
      %p52 = por %p50, %p51
      %p53 = scmp.ne.s32.totalorder %s42, %s45
      %p54 = scmp.eq.s32.totalorder %s25, 2
      %p55 = por %p53, %p54
      %p56 = scmp.ne.s32.totalorder %s45, %s46
      %p57 = scmp.eq.s32.totalorder %s25, 0
      %p58 = por %p56, %p57
      %p59 = scmp.ne.s32.totalorder %s45, %s46
      %p60 = scmp.eq.s32.totalorder %s26, 2
      %p61 = por %p59, %p60
      %p63 = scmp.ne.s32.totalorder %s46, %s62
      %p64 = scmp.eq.s32.totalorder %s26, 0
      %p65 = por %p63, %p64
      %s66 = ssub.s32 %s27, %s39
      %p67 = scmp.eq.s32.totalorder %s66, 0
      %s69 = sadd.s32 %s68, 1
      %s70 = scalar_select %p67, %s68, %s69
      %p73 = pneg %p67
      %p74 = scmp.eq.s32.totalorder %s20, 2
      %p75 = por %p73, %p74
      %p76 = scmp.ne.s32.totalorder %s68, %s71
      %p77 = scmp.eq.s32.totalorder %s20, 0
      %p78 = por %p76, %p77
      %p79 = scmp.ne.s32.totalorder %s68, %s71
      %p80 = scmp.eq.s32.totalorder %s25, 2
      %p81 = por %p79, %p80
      %p82 = scmp.ne.s32.totalorder %s71, %s72
      %p83 = scmp.eq.s32.totalorder %s25, 0
      %p84 = por %p82, %p83
      %p85 = scmp.ne.s32.totalorder %s71, %s72
      %p86 = scmp.eq.s32.totalorder %s26, 2
      %p87 = por %p85, %p86
      %p89 = scmp.ne.s32.totalorder %s72, %s88
      %p90 = scmp.eq.s32.totalorder %s26, 0
      %p91 = por %p89, %p90
      %s92 = ssub.s32 %s27, %s39
      %p93 = scmp.eq.s32.totalorder %s92, 0
      %s95 = sadd.s32 %s94, 1
      %s96 = scalar_select %p93, %s94, %s95
      %p99 = pneg %p93
      %p100 = scmp.eq.s32.totalorder %s20, 2
      %p101 = por %p99, %p100
      %p102 = scmp.ne.s32.totalorder %s94, %s97
      %p103 = scmp.eq.s32.totalorder %s20, 0
      %p104 = por %p102, %p103
      %p105 = scmp.ne.s32.totalorder %s94, %s97
      %p106 = scmp.eq.s32.totalorder %s25, 2
      %p107 = por %p105, %p106
      %p108 = scmp.ne.s32.totalorder %s97, %s98
      %p109 = scmp.eq.s32.totalorder %s25, 0
      %p110 = por %p108, %p109
      %p111 = scmp.ne.s32.totalorder %s97, %s98
      %p112 = scmp.eq.s32.totalorder %s26, 2
      %p113 = por %p111, %p112
      %p115 = scmp.ne.s32.totalorder %s98, %s114
      %p116 = scmp.eq.s32.totalorder %s26, 0
      %p117 = por %p115, %p116
      %s118 = ssub.s32 %s28, %s35
      %p119 = scmp.eq.s32.totalorder %s118, 0
      %s121 = sadd.s32 %s120, 1
      %s122 = scalar_select %p119, %s120, %s121
      %p125 = pneg %p119
      %p126 = scmp.eq.s32.totalorder %s20, 2
      %p127 = por %p125, %p126
      %p128 = scmp.ne.s32.totalorder %s120, %s123
      %p129 = scmp.eq.s32.totalorder %s20, 0
      %p130 = por %p128, %p129
      %p131 = scmp.ne.s32.totalorder %s120, %s123
      %p132 = scmp.eq.s32.totalorder %s25, 2
      %p133 = por %p131, %p132
      %p134 = scmp.ne.s32.totalorder %s123, %s124
      %p135 = scmp.eq.s32.totalorder %s25, 0
      %p136 = por %p134, %p135
      %p137 = scmp.ne.s32.totalorder %s123, %s124
      %p138 = scmp.eq.s32.totalorder %s26, 2
      %p139 = por %p137, %p138
      %p141 = scmp.ne.s32.totalorder %s124, %s140
      %p142 = scmp.eq.s32.totalorder %s26, 0
      %p143 = por %p141, %p142
      %s144 = ssub.s32 %s28, %s35
      %p145 = scmp.eq.s32.totalorder %s144, 0
      %s147 = sadd.s32 %s146, 1
      %s148 = scalar_select %p145, %s146, %s147
      %p151 = pneg %p145
      %p152 = scmp.eq.s32.totalorder %s20, 2
      %p153 = por %p151, %p152
      %p154 = scmp.ne.s32.totalorder %s146, %s149
      %p155 = scmp.eq.s32.totalorder %s20, 0
      %p156 = por %p154, %p155
      %p157 = scmp.ne.s32.totalorder %s146, %s149
      %p158 = scmp.eq.s32.totalorder %s25, 2
      %p159 = por %p157, %p158
      %p160 = scmp.ne.s32.totalorder %s149, %s150
      %p161 = scmp.eq.s32.totalorder %s25, 0
      %p162 = por %p160, %p161
      %p163 = scmp.ne.s32.totalorder %s149, %s150
      %p164 = scmp.eq.s32.totalorder %s26, 2
      %p165 = por %p163, %p164
      %p167 = scmp.ne.s32.totalorder %s150, %s166
      %p168 = scmp.eq.s32.totalorder %s26, 0
      %p169 = por %p167, %p168
      %s170 = ssub.s32 %s28, %s35
      %p171 = scmp.eq.s32.totalorder %s170, 0
      %s173 = sadd.s32 %s172, 1
      %s174 = scalar_select %p171, %s172, %s173
      %p177 = pneg %p171
      %p178 = scmp.eq.s32.totalorder %s20, 2
      %p179 = por %p177, %p178
      %p180 = scmp.ne.s32.totalorder %s172, %s175
      %p181 = scmp.eq.s32.totalorder %s20, 0
      %p182 = por %p180, %p181
      %p183 = scmp.ne.s32.totalorder %s172, %s175
      %p184 = scmp.eq.s32.totalorder %s25, 2
      %p185 = por %p183, %p184
      %p186 = scmp.ne.s32.totalorder %s175, %s176
      %p187 = scmp.eq.s32.totalorder %s25, 0
      %p188 = por %p186, %p187
      %p189 = scmp.ne.s32.totalorder %s175, %s176
      %p190 = scmp.eq.s32.totalorder %s26, 2
      %p191 = por %p189, %p190
      %p193 = scmp.ne.s32.totalorder %s176, %s192
      %p194 = scmp.eq.s32.totalorder %s26, 0
      %p195 = por %p193, %p194
      %s196 = ssub.s32 %s28, %s35
      %p197 = scmp.eq.s32.totalorder %s196, 0
      %s199 = sadd.s32 %s198, 1
      %s200 = scalar_select %p197, %s198, %s199
      %p203 = pneg %p197
      %p204 = scmp.eq.s32.totalorder %s20, 2
      %p205 = por %p203, %p204
      %p206 = scmp.ne.s32.totalorder %s198, %s201
      %p207 = scmp.eq.s32.totalorder %s20, 0
      %p208 = por %p206, %p207
      %p209 = scmp.ne.s32.totalorder %s198, %s201
      %p210 = scmp.eq.s32.totalorder %s25, 2
      %p211 = por %p209, %p210
      %p212 = scmp.ne.s32.totalorder %s201, %s202
      %p213 = scmp.eq.s32.totalorder %s25, 0
      %p214 = por %p212, %p213
      %p215 = scmp.ne.s32.totalorder %s201, %s202
      %p216 = scmp.eq.s32.totalorder %s26, 2
      %p217 = por %p215, %p216
      %p219 = scmp.ne.s32.totalorder %s202, %s218
      %p220 = scmp.eq.s32.totalorder %s26, 0
      %p221 = por %p219, %p220
      %s222 = ssub.s32 %s27, %s39
      %p223 = scmp.eq.s32.totalorder %s222, 0
      %s225 = sadd.s32 %s224, 1
      %s226 = scalar_select %p223, %s224, %s225
      %p229 = pneg %p223
      %p230 = scmp.eq.s32.totalorder %s20, 2
      %p231 = por %p229, %p230
      %p232 = scmp.ne.s32.totalorder %s224, %s227
      %p233 = scmp.eq.s32.totalorder %s20, 0
      %p234 = por %p232, %p233
      %p235 = scmp.ne.s32.totalorder %s224, %s227
      %p236 = scmp.eq.s32.totalorder %s25, 2
      %p237 = por %p235, %p236
      %p238 = scmp.ne.s32.totalorder %s227, %s228
      %p239 = scmp.eq.s32.totalorder %s25, 0
      %p240 = por %p238, %p239
      %p241 = scmp.ne.s32.totalorder %s227, %s228
      %p242 = scmp.eq.s32.totalorder %s26, 2
      %p243 = por %p241, %p242
      %p245 = scmp.ne.s32.totalorder %s228, %s244
      %p246 = scmp.eq.s32.totalorder %s26, 0
      %p247 = por %p245, %p246
      %p248 = scmp.le.s32.totalorder 1, %s20
      %p249 = scmp.lt.s32.totalorder %s20, 4
      %p250 = pnand %p248, %p249
      %p251 = pneg %p250
      // Predicated region
      $region9: #{tpu_custom_call.1} parent=5 // pred_check
        _
      $region10: #{tpu_custom_call.1} parent=5 // pred_check_branch
        %253 = sbr.rel (%p250) target = $region12
      $region11: #{tpu_custom_call.1} parent=5 // pred_region
        %s254 = ssub.s32 %s20, 1
        // Predicated region
        $region13: #{tpu_custom_call.1} parent=11 // pred_check
          %p255 = pneg %p58
        $region14: #{tpu_custom_call.1} parent=11 // pred_check_branch
          %257 = sbr.rel (%p255) target = $region16
        $region15: #{tpu_custom_call.1} parent=11 // pred_region
          %s258 = smul.u32 2, %s29
          %p259 = scmp.lt.s32.totalorder %s258, 1
          %s260 = scalar_select %p259, %s258, 1
          %s261 = smul.addr %s260, 2
          %s262 = smul.addr %s261, 4
          %s263 = scalar_lea.vmem %s0, %s262
          %s264 = smul.u32 2, %s29
        $region16: #{tpu_custom_call.1} parent=11 // pred_fallthru
          _
        // Predicated region
        $region17: #{tpu_custom_call.1} parent=11 // pred_check
          %p265 = pneg %p84
        $region18: #{tpu_custom_call.1} parent=11 // pred_check_branch
          %267 = sbr.rel (%p265) target = $region20
        $region19: #{tpu_custom_call.1} parent=11 // pred_region
          %s268 = smul.u32 2, %s29
          %p269 = scmp.lt.s32.totalorder %s268, 1
          %s270 = scalar_select %p269, %s268, 1
          %s271 = smul.addr %s270, 2
          %s272 = smul.addr %s271, 8
          %s273 = scalar_lea.vmem %s1, %s272
          %s274 = smul.u32 2, %s29
        $region20: #{tpu_custom_call.1} parent=11 // pred_fallthru
          _
        // Predicated region
        $region21: #{tpu_custom_call.1} parent=11 // pred_check
          %p275 = pneg %p110
        $region22: #{tpu_custom_call.1} parent=11 // pred_check_branch
          %277 = sbr.rel (%p275) target = $region24
        $region23: #{tpu_custom_call.1} parent=11 // pred_region
          %s278 = smul.u32 2, %s29
          %p279 = scmp.lt.s32.totalorder %s278, 1
          %s280 = scalar_select %p279, %s278, 1
          %s281 = scalar_lea.vmem %s2, %s280
          %s282 = smul.u32 2, %s29
        $region24: #{tpu_custom_call.1} parent=11 // pred_fallthru
          _
      $region12: #{tpu_custom_call.1} parent=5 // pred_fallthru
        _
      %p283 = scmp.lt.s32.totalorder %s20, 3
      // Predicated region
      $region25: #{tpu_custom_call.1} parent=5 // pred_check
        %p284 = pneg %p283
      $region26: #{tpu_custom_call.1} parent=5 // pred_check_branch
        %286 = sbr.rel (%p284) target = $region28
      $region27: #{tpu_custom_call.1} parent=5 // pred_region
        // Predicated region
        $region29: #{tpu_custom_call.1} parent=27 // pred_check
          %p287 = pneg %p130
        $region30: #{tpu_custom_call.1} parent=27 // pred_check_branch
          %289 = sbr.rel (%p287) target = $region32
        $region31: #{tpu_custom_call.1} parent=27 // pred_region
          %s290 = sand.u32 %s120, 1
          %s291 = scalar_lea.sflag [#allocation4], %s290
          %s292 = sand.u32 %s120, 1
          %s293 = smul.addr %s292, 64
          %s294 = scalar_lea.vmem [#allocation3], %s293
          %s296 = ssub.s32 1024, 1024
          %297 = vsyncadd %s291, %s296
          %s298 = smul.addr %s28, 16
          %s299 = smul.addr %s298, 64
          %s300 = scalar_lea.hbm %s3, %s299
          %s301 = sshll.u32 %s294, 4
          %s302 = int_to_ptr.vmem [resolvable:$true] %s301
          %307 = dma.hbm_to_vmem [thread:$0]  %s300, 1024, %s302, %s291, 64, 64, 4
        $region32: #{tpu_custom_call.1} parent=27 // pred_fallthru
          _
        // Predicated region
        $region33: #{tpu_custom_call.1} parent=27 // pred_check
          %p308 = pneg %p156
        $region34: #{tpu_custom_call.1} parent=27 // pred_check_branch
          %310 = sbr.rel (%p308) target = $region36
        $region35: #{tpu_custom_call.1} parent=27 // pred_region
          %s311 = sand.u32 %s146, 1
          %s312 = scalar_lea.sflag [#allocation7], %s311
          %s313 = sand.u32 %s146, 1
          %s314 = smul.addr %s313, 64
          %s315 = scalar_lea.vmem [#allocation6], %s314
          %s317 = ssub.s32 1024, 1024
          %318 = vsyncadd %s312, %s317
          %s319 = smul.addr %s28, 16
          %s320 = smul.addr %s319, 64
          %s321 = scalar_lea.hbm %s4, %s320
          %s322 = sshll.u32 %s315, 4
          %s323 = int_to_ptr.vmem [resolvable:$true] %s322
          %328 = dma.hbm_to_vmem [thread:$0]  %s321, 1024, %s323, %s312, 64, 64, 4
        $region36: #{tpu_custom_call.1} parent=27 // pred_fallthru
          _
        // Predicated region
        $region37: #{tpu_custom_call.1} parent=27 // pred_check
          %p329 = pneg %p182
        $region38: #{tpu_custom_call.1} parent=27 // pred_check_branch
          %331 = sbr.rel (%p329) target = $region40
        $region39: #{tpu_custom_call.1} parent=27 // pred_region
          %p332 = scmp.lt.s32.totalorder %s28, 2
          %s333 = scalar_select %p332, %s28, 2
          %s334 = scalar_lea.vmem %s5, %s333
        $region40: #{tpu_custom_call.1} parent=27 // pred_fallthru
          _
        // Predicated region
        $region41: #{tpu_custom_call.1} parent=27 // pred_check
          %p335 = pneg %p208
        $region42: #{tpu_custom_call.1} parent=27 // pred_check_branch
          %337 = sbr.rel (%p335) target = $region44
        $region43: #{tpu_custom_call.1} parent=27 // pred_region
          %p338 = scmp.lt.s32.totalorder %s28, 2
          %s339 = scalar_select %p338, %s28, 2
          %s340 = scalar_lea.vmem %s6, %s339
        $region44: #{tpu_custom_call.1} parent=27 // pred_fallthru
          _
      $region28: #{tpu_custom_call.1} parent=5 // pred_fallthru
        _
      %p341 = scmp.le.s32.totalorder 1, %s20
      %p342 = scmp.lt.s32.totalorder %s20, 4
      %p343 = pnand %p341, %p342
      %p344 = pneg %p343
      // Predicated region
      $region45: #{tpu_custom_call.1} parent=5 // pred_check
        _
      $region46: #{tpu_custom_call.1} parent=5 // pred_check_branch
        %346 = sbr.rel (%p343) target = $region48
      $region47: #{tpu_custom_call.1} parent=5 // pred_region
        %s347 = ssub.s32 %s20, 1
        %s348 = sand.u32 %s123, 1
        %s349 = scalar_lea.sflag [#allocation4], %s348
        %s350 = sand.u32 %s123, 1
        %s351 = smul.addr %s350, 64
        %s352 = scalar_lea.vmem [#allocation3], %s351
        // Predicated region
        $region49: #{tpu_custom_call.1} parent=47 // pred_check
          %p353 = pneg %p136
        $region50: #{tpu_custom_call.1} parent=47 // pred_check_branch
          %355 = sbr.rel (%p353) target = $region52
        $region51: #{tpu_custom_call.1} parent=47 // pred_region
          %356 = dma.done %s349, 1024
        $region52: #{tpu_custom_call.1} parent=47 // pred_fallthru
          _
        %s357 = sand.u32 %s149, 1
        %s358 = scalar_lea.sflag [#allocation7], %s357
        %s359 = sand.u32 %s149, 1
        %s360 = smul.addr %s359, 64
        %s361 = scalar_lea.vmem [#allocation6], %s360
        // Predicated region
        $region53: #{tpu_custom_call.1} parent=47 // pred_check
          %p362 = pneg %p162
        $region54: #{tpu_custom_call.1} parent=47 // pred_check_branch
          %364 = sbr.rel (%p362) target = $region56
        $region55: #{tpu_custom_call.1} parent=47 // pred_region
          %365 = dma.done %s358, 1024
        $region56: #{tpu_custom_call.1} parent=47 // pred_fallthru
          _
        %s366 = smul.u32 2, %s29
        %p367 = scmp.lt.s32.totalorder %s366, 1
        %s368 = scalar_select %p367, %s366, 1
        %s369 = smul.addr %s368, 2
        %s370 = smul.addr %s369, 4
        %s371 = scalar_lea.vmem %s0, %s370
        %p372 = pneg %p58
        %p373 = pneg %p55
        %s374 = smul.u32 2, %s29
        %p375 = scmp.lt.s32.totalorder %s374, 1
        %s376 = scalar_select %p375, %s374, 1
        %s377 = smul.addr %s376, 2
        %s378 = smul.addr %s377, 8
        %s379 = scalar_lea.vmem %s1, %s378
        %p380 = pneg %p84
        %p381 = pneg %p81
        %s382 = smul.u32 2, %s29
        %p383 = scmp.lt.s32.totalorder %s382, 1
        %s384 = scalar_select %p383, %s382, 1
        %s385 = scalar_lea.vmem %s2, %s384
        %p386 = pneg %p110
        %p387 = pneg %p107
        %s388 = sand.u32 %s123, 1
        %s389 = scalar_lea.sflag [#allocation4], %s388
        %s390 = sand.u32 %s123, 1
        %s391 = smul.addr %s390, 64
        %s392 = scalar_lea.vmem [#allocation3], %s391
        %p393 = pneg %p136
        %p394 = pneg %p133
        %s395 = sand.u32 %s149, 1
        %s396 = scalar_lea.sflag [#allocation7], %s395
        %s397 = sand.u32 %s149, 1
        %s398 = smul.addr %s397, 64
        %s399 = scalar_lea.vmem [#allocation6], %s398
        %p400 = pneg %p162
        %p401 = pneg %p159
        %p402 = scmp.lt.s32.totalorder %s30, 2
        %s403 = scalar_select %p402, %s30, 2
        %s404 = scalar_lea.vmem %s5, %s403
        %p405 = pneg %p188
        %p406 = pneg %p185
        %p407 = scmp.lt.s32.totalorder %s30, 2
        %s408 = scalar_select %p407, %s30, 2
        %s409 = scalar_lea.vmem %s6, %s408
        %p410 = pneg %p214
        %p411 = pneg %p211
        %p412 = pneg %p240
        %p413 = pneg %p237
        %s414 = smul.u32 2, %s29
        %p415 = scmp.lt.s32.totalorder %s414, 1
        %s416 = scalar_select %p415, %s414, 1
        %s417 = smul.addr %s416, 2
        %s418 = smul.addr %s417, 4
        %s419 = scalar_lea.vmem %s0, %s418
        %s420 = smul.u32 2, %s29
        %s421 = smul.u32 2, %s29
        %p422 = scmp.lt.s32.totalorder %s421, 1
        %s423 = scalar_select %p422, %s421, 1
        %s424 = smul.addr %s423, 2
        %s425 = smul.addr %s424, 8
        %s426 = scalar_lea.vmem %s1, %s425
        %s427 = smul.u32 2, %s29
        %s428 = smul.u32 2, %s29
        %p429 = scmp.lt.s32.totalorder %s428, 1
        %s430 = scalar_select %p429, %s428, 1
        %s431 = scalar_lea.vmem %s2, %s430
        %s432 = smul.u32 2, %s29
        %p433 = scmp.lt.s32.totalorder %s30, 2
        %s434 = scalar_select %p433, %s30, 2
        %s435 = scalar_lea.vmem %s5, %s434
        %p436 = scmp.lt.s32.totalorder %s30, 2
        %s437 = scalar_select %p436, %s30, 2
        %s438 = scalar_lea.vmem %s6, %s437
        %s439 = smul.u32 2, %s29
        %p441 = scmp.eq.s32.totalorder %s30, 0
        // Predicated region
        $region57: #{tpu_custom_call.1} parent=47 // pred_check
          %p442 = pneg %p441
        $region58: #{tpu_custom_call.1} parent=47 // pred_check_branch
          %444 = sbr.rel (%p442) target = $region60
        $region59: #{tpu_custom_call.1} parent=47 // pred_region
          %v445 = vld [vmem:[%s419] sm:$0xf]
          %v446 = vld [vmem:[%s419 + $0x4] sm:$0xf]
          %v447 = vld [vmem:[%s419 + $0x8] sm:$0xf]
          %v448 = vld [vmem:[%s419 + $0xc] sm:$0xf]
          %v449 = vunpack.c.l.bf16 %v445
          %v450 = vunpack.c.l.bf16 %v446
          %v451 = vunpack.c.l.bf16 %v447
          %v452 = vunpack.c.l.bf16 %v448
          %453 = vst [vmem:[#allocation2] sm:$0xff] %v449
          %454 = vst [vmem:[#allocation2 + $0x8] sm:$0xff] %v450
          %455 = vst [vmem:[#allocation2 + $0x10] sm:$0xff] %v451
          %456 = vst [vmem:[#allocation2 + $0x18] sm:$0xff] %v452
        $region60: #{tpu_custom_call.1} parent=47 // pred_fallthru
          _
        %v457 = vld [vmem:[#allocation2] sm:$0xff]
        %v458 = vld [vmem:[#allocation2 + $0x8] sm:$0xff]
        %v459 = vld [vmem:[#allocation2 + $0x10] sm:$0xff]
        %v460 = vld [vmem:[#allocation2 + $0x18] sm:$0xff]
        %v461 = vld [vmem:[%s426] sm:$0xff]
        %v462 = vld [vmem:[%s426 + $0x8] sm:$0xff]
        %v463 = vld [vmem:[%s426 + $0x10] sm:$0xff]
        %v464 = vld [vmem:[%s426 + $0x18] sm:$0xff]
        %v465 = vld [vmem:[%s431] sm:$0x1]
        %v466 = vld [vmem:[%s431 + $0x1] sm:$0x1]
        %v469 = vlaneseq
        %v470 = vshrl.u32 %v469, 7
        %v471 = vsub.s32 0, %v470
        %v472 = vrot.slane %v465, %v471
        %v473 = vlaneseq
        %v474 = vshrl.u32 %v473, 7
        %v475 = vsub.s32 0, %v474
        %v476 = vrot.slane %v466, %v475
        %v479 = vmul.f32 %v461, %v472
        %v480 = vmul.f32 %v462, %v472
        %v481 = vmul.f32 %v463, %v476
        %v482 = vmul.f32 %v464, %v476
        %v483 = vld [vmem:[%s352] sm:$0xf]
        %v484 = vld [vmem:[%s352 + $0x4] sm:$0xf]
        %v485 = vld [vmem:[%s352 + $0x8] sm:$0xf]
        %v486 = vld [vmem:[%s352 + $0xc] sm:$0xf]
        %v487 = vld [vmem:[%s352 + $0x10] sm:$0xf]
        %v488 = vld [vmem:[%s352 + $0x14] sm:$0xf]
        %v489 = vld [vmem:[%s352 + $0x18] sm:$0xf]
        %v490 = vld [vmem:[%s352 + $0x1c] sm:$0xf]
        %v491 = vld [vmem:[%s352 + $0x20] sm:$0xf]
        %v492 = vld [vmem:[%s352 + $0x24] sm:$0xf]
        %v493 = vld [vmem:[%s352 + $0x28] sm:$0xf]
        %v494 = vld [vmem:[%s352 + $0x2c] sm:$0xf]
        %v495 = vld [vmem:[%s352 + $0x30] sm:$0xf]
        %v496 = vld [vmem:[%s352 + $0x34] sm:$0xf]
        %v497 = vld [vmem:[%s352 + $0x38] sm:$0xf]
        %v498 = vld [vmem:[%s352 + $0x3c] sm:$0xf]
        %v499 = vld [vmem:[%s361] sm:$0xf]
        %v500 = vld [vmem:[%s361 + $0x4] sm:$0xf]
        %v501 = vld [vmem:[%s361 + $0x8] sm:$0xf]
        %v502 = vld [vmem:[%s361 + $0xc] sm:$0xf]
        %v503 = vld [vmem:[%s361 + $0x10] sm:$0xf]
        %v504 = vld [vmem:[%s361 + $0x14] sm:$0xf]
        %v505 = vld [vmem:[%s361 + $0x18] sm:$0xf]
        %v506 = vld [vmem:[%s361 + $0x1c] sm:$0xf]
        %v507 = vld [vmem:[%s361 + $0x20] sm:$0xf]
        %v508 = vld [vmem:[%s361 + $0x24] sm:$0xf]
        %v509 = vld [vmem:[%s361 + $0x28] sm:$0xf]
        %v510 = vld [vmem:[%s361 + $0x2c] sm:$0xf]
        %v511 = vld [vmem:[%s361 + $0x30] sm:$0xf]
        %v512 = vld [vmem:[%s361 + $0x34] sm:$0xf]
        %v513 = vld [vmem:[%s361 + $0x38] sm:$0xf]
        %v514 = vld [vmem:[%s361 + $0x3c] sm:$0xf]
        %v515 = vld [vmem:[%s435] sm:$0x1]
        %v516 = vld [vmem:[%s438] sm:$0x1]
        %v517 = vpack.c.bf16 %v458, %v457
        %v518 = vpack.c.bf16 %v460, %v459
        %v520 = vlaneseq
        %v521 = vshrl.u32 %v520, 7
        %v522 = vsub.s32 0, %v521
        %v523 = vrot.slane %v515, %v522
        %v541 = vunpack.c.l.b16 %v483
        %v542 = vunpack.c.l.b16 %v484
        %v543 = vunpack.c.l.b16 %v485
        %v544 = vunpack.c.l.b16 %v486
        %v545 = vunpack.c.l.b16 %v487
        %v546 = vunpack.c.l.b16 %v488
        %v547 = vunpack.c.l.b16 %v489
        %v548 = vunpack.c.l.b16 %v490
        %v549 = vunpack.c.l.b16 %v491
        %v550 = vunpack.c.l.b16 %v492
        %v551 = vunpack.c.l.b16 %v493
        %v552 = vunpack.c.l.b16 %v494
        %v553 = vunpack.c.l.b16 %v495
        %v554 = vunpack.c.l.b16 %v496
        %v555 = vunpack.c.l.b16 %v497
        %v556 = vunpack.c.l.b16 %v498
        %v557 = vpack.c.b16 %v542, %v541
        %v558 = vpack.c.b16 %v544, %v543
        %v559 = vpack.c.b16 %v546, %v545
        %v560 = vpack.c.b16 %v548, %v547
        %v561 = vpack.c.b16 %v550, %v549
        %v562 = vpack.c.b16 %v552, %v551
        %v563 = vpack.c.b16 %v554, %v553
        %v564 = vpack.c.b16 %v556, %v555
        %573 = vmatprep.subr.bf16.mxu0 0
        %574 = vmatpush1.bf16.msra.mxu0 %v557
        %575 = vmatprep.subr.bf16.mxu0 0
        %576 = vmatpush1.bf16.msra.mxu0 %v558
        %577 = vmatprep.subr.bf16.mxu0 0
        %578 = vmatpush1.bf16.msra.mxu0 %v559
        %579 = vmatprep.subr.bf16.mxu0 0
        %580 = vmatpush1.bf16.msra.mxu0 %v560
        %581 = vmatprep.subr.bf16.mxu0 0
        %582 = vmatpush1.bf16.msra.mxu0 %v561
        %583 = vmatprep.subr.bf16.mxu0 0
        %584 = vmatpush1.bf16.msra.mxu0 %v562
        %585 = vmatprep.subr.bf16.mxu0 0
        %586 = vmatpush1.bf16.msra.mxu0 %v563
        %587 = vmatprep.subr.bf16.mxu0 0
        %588 = vmatpush1.bf16.msra.mxu0 %v564
        %589 = vmatprep.subr.bf16.mxu0 0
        %590 = vmatpush1.bf16.msra.mxu0 0
        %591 = vmatprep.subr.bf16.mxu0 0
        %592 = vmatpush1.bf16.msra.mxu0 0
        %593 = vmatprep.subr.bf16.mxu0 0
        %594 = vmatpush1.bf16.msra.mxu0 0
        %595 = vmatprep.subr.bf16.mxu0 0
        %596 = vmatpush1.bf16.msra.mxu0 0
        %597 = vmatprep.subr.bf16.mxu0 0
        %598 = vmatpush1.bf16.msra.mxu0 0
        %599 = vmatprep.subr.bf16.mxu0 0
        %600 = vmatpush1.bf16.msra.mxu0 0
        %601 = vmatprep.subr.bf16.mxu0 0
        %602 = vmatpush1.bf16.msra.mxu0 0
        %603 = vmatprep.subr.bf16.mxu0 0
        %604 = vmatpush1.bf16.msra.mxu0 0
        %605 = vmatprep.mubr.bf16.mxu0 0
        %606 = vmatmul.mubr.bf16.gmra.mrb[0].mxu0 %v517
        %v607 = vpop.f32.mrb[0].mxu0
        %v608 = vadd.f32 %v523, %v607
        %v609 = vpop.f32.mrb[0].mxu0
        %v610 = vpop.f32.mrb[0].mxu0
        %v611 = vadd.f32 %v523, %v610
        %v612 = vpop.f32.mrb[0].mxu0
        %613 = vmatprep.mubr.bf16.mxu0 0
        %614 = vmatmul.mubr.bf16.gmra.mrb[0].mxu0 %v518
        %v615 = vpop.f32.mrb[0].mxu0
        %v616 = vadd.f32 %v523, %v615
        %v617 = vpop.f32.mrb[0].mxu0
        %v618 = vpop.f32.mrb[0].mxu0
        %v619 = vadd.f32 %v523, %v618
        %v620 = vpop.f32.mrb[0].mxu0
        %621 = vdwg.mxu0
        %v622 = vadd.f32 %v457, %v458
        %v623 = vrot.slane %v622, 4
        %v624 = vadd.f32 %v622, %v623
        %v625 = vrot.slane %v624, 2
        %v626 = vadd.f32 %v624, %v625
        %v627 = vrot.slane %v626, 1
        %v628 = vadd.f32 %v626, %v627
        %v629 = vadd.f32 %v459, %v460
        %v630 = vrot.slane %v629, 4
        %v631 = vadd.f32 %v629, %v630
        %v632 = vrot.slane %v631, 2
        %v633 = vadd.f32 %v631, %v632
        %v634 = vrot.slane %v633, 1
        %v635 = vadd.f32 %v633, %v634
        %v636 = vpack.c.bf16 %v628, %v628
        %v637 = vpack.c.bf16 %v635, %v635
        %v639 = vlaneseq
        %v640 = vshrl.u32 %v639, 7
        %v641 = vsub.s32 0, %v640
        %v642 = vrot.slane %v516, %v641
        %v646 = vunpack.c.l.b16 %v636
        %v647 = vunpack.c.l.b16 %v637
        %vm648 = vcmask 1041409
        %v649 = vsel %vm648, %v647, %v646
        %v650 = vpack.c.b16 %v649, %v649
        %v668 = vunpack.c.l.b16 %v499
        %v669 = vunpack.c.l.b16 %v500
        %v670 = vunpack.c.l.b16 %v501
        %v671 = vunpack.c.l.b16 %v502
        %v672 = vunpack.c.l.b16 %v503
        %v673 = vunpack.c.l.b16 %v504
        %v674 = vunpack.c.l.b16 %v505
        %v675 = vunpack.c.l.b16 %v506
        %v676 = vunpack.c.l.b16 %v507
        %v677 = vunpack.c.l.b16 %v508
        %v678 = vunpack.c.l.b16 %v509
        %v679 = vunpack.c.l.b16 %v510
        %v680 = vunpack.c.l.b16 %v511
        %v681 = vunpack.c.l.b16 %v512
        %v682 = vunpack.c.l.b16 %v513
        %v683 = vunpack.c.l.b16 %v514
        %v684 = vpack.c.b16 %v669, %v668
        %v685 = vpack.c.b16 %v671, %v670
        %v686 = vpack.c.b16 %v673, %v672
        %v687 = vpack.c.b16 %v675, %v674
        %v688 = vpack.c.b16 %v677, %v676
        %v689 = vpack.c.b16 %v679, %v678
        %v690 = vpack.c.b16 %v681, %v680
        %v691 = vpack.c.b16 %v683, %v682
        %700 = vmatprep.subr.bf16.mxu0 0
        %701 = vmatpush1.bf16.msra.mxu0 %v684
        %702 = vmatprep.subr.bf16.mxu0 0
        %703 = vmatpush1.bf16.msra.mxu0 %v685
        %704 = vmatprep.subr.bf16.mxu0 0
        %705 = vmatpush1.bf16.msra.mxu0 %v686
        %706 = vmatprep.subr.bf16.mxu0 0
        %707 = vmatpush1.bf16.msra.mxu0 %v687
        %708 = vmatprep.subr.bf16.mxu0 0
        %709 = vmatpush1.bf16.msra.mxu0 %v688
        %710 = vmatprep.subr.bf16.mxu0 0
        %711 = vmatpush1.bf16.msra.mxu0 %v689
        %712 = vmatprep.subr.bf16.mxu0 0
        %713 = vmatpush1.bf16.msra.mxu0 %v690
        %714 = vmatprep.subr.bf16.mxu0 0
        %715 = vmatpush1.bf16.msra.mxu0 %v691
        %716 = vmatprep.subr.bf16.mxu0 0
        %717 = vmatpush1.bf16.msra.mxu0 0
        %718 = vmatprep.subr.bf16.mxu0 0
        %719 = vmatpush1.bf16.msra.mxu0 0
        %720 = vmatprep.subr.bf16.mxu0 0
        %721 = vmatpush1.bf16.msra.mxu0 0
        %722 = vmatprep.subr.bf16.mxu0 0
        %723 = vmatpush1.bf16.msra.mxu0 0
        %724 = vmatprep.subr.bf16.mxu0 0
        %725 = vmatpush1.bf16.msra.mxu0 0
        %726 = vmatprep.subr.bf16.mxu0 0
        %727 = vmatpush1.bf16.msra.mxu0 0
        %728 = vmatprep.subr.bf16.mxu0 0
        %729 = vmatpush1.bf16.msra.mxu0 0
        %730 = vmatprep.subr.bf16.mxu0 0
        %731 = vmatpush1.bf16.msra.mxu0 0
        %732 = vmatprep.mubr.bf16.mxu0 0
        %733 = vmatmul.mubr.bf16.gmra.mrb[0].mxu0 %v650
        %v734 = vpop.f32.mrb[0].mxu0
        %v735 = vadd.f32 %v642, %v734
        %v736 = vpop.f32.mrb[0].mxu0
        %v737 = vpop.f32.mrb[0].mxu0
        %v738 = vpop.f32.mrb[0].mxu0
        %739 = vdwg.mxu0
        %741 = vset.pattern.permute.xlu0 0
        %742 = vperm.xlu0 %741, %v461
        %v743 = vpop.permute.xlu0 %742
        %746 = vset.pattern.permute.xlu0 0
        %747 = vperm.xlu0 %746, %v462
        %v748 = vpop.permute.xlu0 %747
        %751 = vset.pattern.permute.xlu0 0
        %752 = vperm.xlu0 %751, %v463
        %v753 = vpop.permute.xlu0 %752
        %756 = vset.pattern.permute.xlu0 0
        %757 = vperm.xlu0 %756, %v464
        %v758 = vpop.permute.xlu0 %757
        %v760 = vmul.f32 %v743, %v608
        %v761 = vmul.f32 %v748, %v611
        %v762 = vmul.f32 %v753, %v616
        %v763 = vmul.f32 %v758, %v619
        %v766 = vunpack.c.l.s4 1966171168
        %v767 = vunpack.c.0.s8 %v766
        %v768 = vlaneseq
        %v769 = vshrl.u32 %v768, 7
        %v770 = vsub.s32 %v767, %v769
        %v771 = vrot.slane %v735, %v770
        %v772 = vcombine.high %v771, %v771
        %v774 = vunpack.c.l.s4 1966171168
        %v775 = vunpack.c.0.s8 %v774
        %v776 = vlaneseq
        %v777 = vshrl.u32 %v776, 7
        %v778 = vsub.s32 %v775, %v777
        %v779 = vrot.slane %v771, %v778
        %v781 = vunpack.c.l.s4 1966171168
        %v782 = vunpack.c.0.s8 %v781
        %v783 = vlaneseq
        %v784 = vshrl.u32 %v783, 7
        %v785 = vsub.s32 %v782, %v784
        %v786 = vrot.slane %v772, %v785
        %788 = vset.pattern.permute.xlu0 0
        %789 = vperm.xlu0 %788, %v479
        %v790 = vpop.permute.xlu0 %789
        %793 = vset.pattern.permute.xlu0 0
        %794 = vperm.xlu0 %793, %v480
        %v795 = vpop.permute.xlu0 %794
        %798 = vset.pattern.permute.xlu0 0
        %799 = vperm.xlu0 %798, %v481
        %v800 = vpop.permute.xlu0 %799
        %803 = vset.pattern.permute.xlu0 0
        %804 = vperm.xlu0 %803, %v482
        %v805 = vpop.permute.xlu0 %804
        %v807 = vlaneseq
        %v808 = vshrl.u32 %v807, 7
        %v809 = vsub.s32 0, %v808
        %v810 = vrot.slane %v779, %v809
        %v811 = vlaneseq
        %v812 = vshrl.u32 %v811, 7
        %v813 = vsub.s32 0, %v812
        %v814 = vrot.slane %v786, %v813
        %v817 = vmul.f32 %v790, %v810
        %v818 = vmul.f32 %v795, %v810
        %v819 = vmul.f32 %v800, %v814
        %v820 = vmul.f32 %v805, %v814
        %v821 = vadd.f32 %v760, %v817
        %v822 = vadd.f32 %v761, %v818
        %v823 = vadd.f32 %v762, %v819
        %v824 = vadd.f32 %v763, %v820
        %p825 = scmp.lt.s32.totalorder %s30, 2
        // Predicated region
        $region61: #{tpu_custom_call.1} parent=47 // pred_check
          %p826 = pneg %p825
        $region62: #{tpu_custom_call.1} parent=47 // pred_check_branch
          %828 = sbr.rel (%p826) target = $region64
        $region63: #{tpu_custom_call.1} parent=47 // pred_region
          %v829 = vtanh.pop %v821
          %v830 = vtanh.pop %v822
          %v831 = vtanh.pop %v823
          %v832 = vtanh.pop %v824
          %833 = vst [vmem:[#allocation2] sm:$0xff] %v829
          %834 = vst [vmem:[#allocation2 + $0x8] sm:$0xff] %v830
          %835 = vst [vmem:[#allocation2 + $0x10] sm:$0xff] %v831
          %836 = vst [vmem:[#allocation2 + $0x18] sm:$0xff] %v832
        $region64: #{tpu_custom_call.1} parent=47 // pred_fallthru
          _
        %p837 = scmp.eq.s32.totalorder %s30, 2
        // Predicated region
        $region65: #{tpu_custom_call.1} parent=47 // pred_check
          %p838 = pneg %p837
        $region66: #{tpu_custom_call.1} parent=47 // pred_check_branch
          %840 = sbr.rel (%p838) target = $region68
        $region67: #{tpu_custom_call.1} parent=47 // pred_region
          %841 = vst [vmem:[#allocation8] sm:$0xff] %v821
          %842 = vst [vmem:[#allocation8 + $0x8] sm:$0xff] %v822
          %843 = vst [vmem:[#allocation8 + $0x10] sm:$0xff] %v823
          %844 = vst [vmem:[#allocation8 + $0x18] sm:$0xff] %v824
        $region68: #{tpu_custom_call.1} parent=47 // pred_fallthru
          _
        // Predicated region
        $region69: #{tpu_custom_call.1} parent=47 // pred_check
          %p845 = pneg %p237
        $region70: #{tpu_custom_call.1} parent=47 // pred_check_branch
          %847 = sbr.rel (%p845) target = $region72
        $region71: #{tpu_custom_call.1} parent=47 // pred_region
          %s848 = smul.u32 2, %s29
          %s850 = ssub.s32 512, 512
          %851 = vsyncadd [#allocation5], %s850
          %s852 = smul.addr %s848, 2
          %s853 = smul.addr %s852, 128
          %s854 = scalar_lea.hbm %s7, %s853
          %s855 = sshll.u32 [#allocation8], 4
          %s856 = int_to_ptr.vmem [resolvable:$true] %s855
          %861 = dma.vmem_to_hbm [thread:$0]  %s856, 512, %s854, [#allocation5], 128, 128, 8
        $region72: #{tpu_custom_call.1} parent=47 // pred_fallthru
          _
        // Predicated region
        $region73: #{tpu_custom_call.1} parent=47 // pred_check
          %p862 = pneg %p237
        $region74: #{tpu_custom_call.1} parent=47 // pred_check_branch
          %864 = sbr.rel (%p862) target = $region76
        $region75: #{tpu_custom_call.1} parent=47 // pred_region
          %865 = dma.done [#allocation5], 512
        $region76: #{tpu_custom_call.1} parent=47 // pred_fallthru
          _
      $region48: #{tpu_custom_call.1} parent=5 // pred_fallthru
        _
      %p866 = scmp.le.s32.totalorder 2, %s20
      // Predicated region
      $region77: #{tpu_custom_call.1} parent=5 // pred_check
        %p867 = pneg %p866
      $region78: #{tpu_custom_call.1} parent=5 // pred_check_branch
        %869 = sbr.rel (%p867) target = $region80
      $region79: #{tpu_custom_call.1} parent=5 // pred_region
        %s870 = ssub.s32 %s20, 2
      $region80: #{tpu_custom_call.1} parent=5 // pred_fallthru
        _
    $region6: #{tpu_custom_call.1} parent=1 // loop_footer
      %s24 = sadd.s32 1, %s20
    $region7: #{tpu_custom_call.1} parent=1 // loop_footer_branch
      %19 = sbr.rel target = $region3
    $region8: #{tpu_custom_call.1} parent=1 // loop_exit
      _
    %871 = vsyncpa [#allocation4], 1
    %s872 = scalar_lea.sflag [#allocation4], 1
    %873 = vsyncpa %s872, 1
    %874 = vsyncpa [#allocation7], 1
    %s875 = scalar_lea.sflag [#allocation7], 1
    %876 = vsyncpa %s875, 1
    %877 = vsyncpa [#allocation5], 1
    %s878 = scalar_lea.sflag [#allocation5], 1
    %879 = vsyncpa %s878, 1

</llo_original>
